<compile_context>
chip_gen: v6e
topology: v6e:2x2x1
jax: 0.10.0
libtpu: 0.0.40
codegen_flags: <defaults>
</compile_context>

<pallas_src>
import jax
import jax.numpy as jnp
from jax import lax
from jax.experimental import pallas as pl
from jax.experimental.pallas import tpu as pltpu

VAR_EPS = 1e-3

_HBM_BLOCK_TARGET = 4 << 20   # ~4 MiB of HBM bytes per grid step (DMA sweet spot)
_F32_BLOCK_CAP = 8 << 20      # cap on the padded f32 working set per block


def _pad_to(x, m):
    return ((x + m - 1) // m) * m


def _gcn_kernel_factory(n):
    """Kernel normalizing along axis 1 of the block (works for 2D and 3D blocks)."""
    inv_n = 1.0 / n
    inv_nm1 = (1.0 / (n - 1)) if n > 1 else float("nan")  # torch var: NaN for N==1

    def kernel(x_ref, o_ref):
        xf = x_ref[...].astype(jnp.float32)                 # stats in f32
        s1 = jnp.sum(xf, axis=1, keepdims=True)             # sum(x)
        s2 = jnp.sum(xf * xf, axis=1, keepdims=True)        # sum(x^2)  (one pass)
        m = s1 * jnp.float32(inv_n)
        # Unbiased variance: (sum(x^2) - n*m^2) / (n-1).  f32 accumulation +
        # eps=1e-3 makes the one-pass form safe here.
        v = (s2 - s1 * m) * jnp.float32(inv_nm1)
        inv = lax.rsqrt(v + jnp.float32(VAR_EPS))            # EUP rsqrt, free slot
        o_ref[...] = ((xf - m) * inv).astype(o_ref.dtype)

    return kernel


def _choose_groups_per_block(num_groups, hbm_group_bytes, vmem_group_f32_bytes, mult):
    """Groups per block: ~4 MiB HBM target, padded-f32 VMEM cap, multiple of `mult`."""
    tg_hbm = _HBM_BLOCK_TARGET // max(hbm_group_bytes, 1)
    tg_vmem = _F32_BLOCK_CAP // max(vmem_group_f32_bytes, 1)
    tg = max(1, min(tg_hbm, tg_vmem))
    if num_groups <= mult:
        return num_groups                     # single block == full array dim (valid)
    tg = max(mult, (tg // mult) * mult)
    tg = min(tg, (num_groups // mult) * mult)
    # Prefer an even grid-step count so v7x's two TensorCores split evenly.
    steps = -(-num_groups // tg)
    if steps > 1 and steps % 2 == 1:
        alt = _pad_to(-(-num_groups // (steps + 1)), mult)
        if alt >= mult and (-(-num_groups // alt)) % 2 == 0:
            tg = alt
    return tg


def _vmem_limit_bytes(groups_per_block, group_f32_bytes, in_itemsize, out_itemsize):
    """Derive the VMEM limit from the padded block footprint (not a hard-coded 48 MiB)."""
    blk_f32 = groups_per_block * group_f32_bytes
    need = int(blk_f32 * (2.0 * in_itemsize / 4.0     # double-buffered input
                          + 2.0 * out_itemsize / 4.0  # double-buffered output
                          + 2.0))                     # in-kernel f32 temporaries
    need += 6 << 20                                   # margin
    # >= v5e/v6e scoped defaults; < v7x's 64 MiB physical VMEM per TensorCore.
    return int(min(max(need, 32 << 20), 60 << 20))


def gcn(x):
    """Context normalization over axis 2 of (B, C, N, W); matches torch gcn."""
    B, C, N, W = x.shape
    itemsize = x.dtype.itemsize
    kernel = _gcn_kernel_factory(N)

    if W == 1:
        # (B, C, N, 1) -> (B*C, N): contiguous reshape (free), lane-dense rows,
        # reduction along lanes.  Note: for N < 128 the stores are lane-masked;
        # accepted (typical production N is in the thousands).
        G = B * C
        x2d = x.reshape(G, N)
        mult = max(8, 32 // max(itemsize, 1))              # 8 for f32, 16 for bf16
        group_f32_bytes = _pad_to(N, 128) * 4              # lane-padded f32 row
        tg = _choose_groups_per_block(G, N * itemsize, group_f32_bytes, mult)
        out2d = pl.pallas_call(
            kernel,
            out_shape=jax.ShapeDtypeStruct((G, N), x.dtype),
            grid_spec=pltpu.PrefetchScalarGridSpec(
                num_scalar_prefetch=0,
                grid=(pl.cdiv(G, tg),),                    # no padding; last block masked
                in_specs=[pl.BlockSpec((tg, N), lambda i: (i, 0))],
                out_specs=pl.BlockSpec((tg, N), lambda i: (i, 0)),
            ),
            compiler_params=pltpu.CompilerParams(
                dimension_semantics=("parallel",),
                vmem_limit_bytes=_vmem_limit_bytes(tg, group_f32_bytes,
                                                   itemsize, itemsize),
            ),
        )(x2d)
        return out2d.reshape(B, C, N, W)

    # W > 1: keep the native layout (no wrapper transposes -> no extra HBM
    # passes).  (B, C, N, W) -> (B*C, N, W); reduce along the sublane (N) axis.
    G = B * C
    x3d = x.reshape(G, N, W)
    group_f32_bytes = _pad_to(N, 8) * _pad_to(W, 128) * 4  # padded VMEM footprint
    tc = _choose_groups_per_block(G, N * W * itemsize, group_f32_bytes, 1)
    out3d = pl.pallas_call(
        kernel,
        out_shape=jax.ShapeDtypeStruct((G, N, W), x.dtype),
        grid_spec=pltpu.PrefetchScalarGridSpec(
            num_scalar_prefetch=0,
            grid=(pl.cdiv(G, tc),),
            in_specs=[pl.BlockSpec((tc, N, W), lambda i: (i, 0, 0))],
            out_specs=pl.BlockSpec((tc, N, W), lambda i: (i, 0, 0)),
        ),
        compiler_params=pltpu.CompilerParams(
            dimension_semantics=("parallel",),
            vmem_limit_bytes=_vmem_limit_bytes(tc, group_f32_bytes,
                                               itemsize, itemsize),
        ),
    )(x3d)
    return out3d.reshape(B, C, N, W)


def gcn_ref(x):
    # Pure-JAX reference mirroring the PyTorch semantics (unbiased variance).
    m = jnp.mean(x, axis=2, keepdims=True)
    v = jnp.var(x, axis=2, keepdims=True, ddof=1)
    inv = 1.0 / jnp.sqrt(v + VAR_EPS)
    return (x - m) * inv


if __name__ == "__main__":
    key = jax.random.PRNGKey(0)

    # Primary check (NCHW shape consistent with the module's usage; W > 1 path).
    B, C, N, W = 2, 4, 16, 16
    x = jax.random.normal(key, (B, C, N, W), dtype=jnp.float32)
    out = jax.block_until_ready(gcn(x))
    ref = gcn_ref(x)
    assert out.shape == (B, C, N, W)
    assert jnp.allclose(out, ref, atol=1e-5, rtol=1e-5), "mismatch vs reference"

    # Secondary check: W == 1 fast path + group count not a multiple of the
    # block size (exercises the masked partial last block).
    key2 = jax.random.PRNGKey(1)
    x2 = jax.random.normal(key2, (2, 6, 32, 1), dtype=jnp.float32)
    out2 = jax.block_until_ready(gcn(x2))
    ref2 = gcn_ref(x2)
    assert jnp.allclose(out2, ref2, atol=1e-5, rtol=1e-5), "mismatch vs reference (W==1)"

    print("KERNEL_OK")
</pallas_src>

<mosaic_0001>
module attributes {stable_mosaic.version = 11 : i64} {
  func.func @kernel(%arg0: i32, %arg1: memref<8x16x16xf32, #tpu.memory_space<vmem>>, %arg2: memref<8x16x16xf32, #tpu.memory_space<vmem>>) attributes {dimension_semantics = [#tpu.dimension_semantics<parallel>], iteration_bounds = array<i64: 1>, scalar_prefetch = 0 : i64, scratch_operands = 0 : i64, tpu.core_type = #tpu.core_type<tc>, window_params = [{transform_indices = @transform_0, window_bounds = array<i64: 8, 16, 16>}, {transform_indices = @transform_1, window_bounds = array<i64: 8, 16, 16>}]} {
    %c0 = arith.constant 0 : index
    %c0_0 = arith.constant 0 : index
    %c0_1 = arith.constant 0 : index
    %0 = vector.load %arg1[%c0, %c0_0, %c0_1] : memref<8x16x16xf32, #tpu.memory_space<vmem>>, vector<8x16x16xf32>
    %cst = arith.constant dense<0.000000e+00> : vector<8x16xf32>
    %1 = vector.multi_reduction <add>, %0, %cst [1] : vector<8x16x16xf32> to vector<8x16xf32>
    %2 = vector.shape_cast %1 : vector<8x16xf32> to vector<8x1x16xf32>
    %3 = arith.mulf %0, %0 : vector<8x16x16xf32>
    %cst_2 = arith.constant dense<0.000000e+00> : vector<8x16xf32>
    %4 = vector.multi_reduction <add>, %3, %cst_2 [1] : vector<8x16x16xf32> to vector<8x16xf32>
    %5 = vector.shape_cast %4 : vector<8x16xf32> to vector<8x1x16xf32>
    %cst_3 = arith.constant 6.250000e-02 : f32
    %6 = vector.broadcast %cst_3 : f32 to vector<8x1x16xf32>
    %7 = arith.mulf %2, %6 : vector<8x1x16xf32>
    %8 = arith.mulf %2, %7 : vector<8x1x16xf32>
    %9 = arith.subf %5, %8 : vector<8x1x16xf32>
    %cst_4 = arith.constant 0.0666666701 : f32
    %10 = vector.broadcast %cst_4 : f32 to vector<8x1x16xf32>
    %11 = arith.mulf %9, %10 : vector<8x1x16xf32>
    %cst_5 = arith.constant 1.000000e-03 : f32
    %12 = vector.broadcast %cst_5 : f32 to vector<8x1x16xf32>
    %13 = arith.addf %11, %12 : vector<8x1x16xf32>
    %14 = math.rsqrt %13 : vector<8x1x16xf32>
    %15 = vector.broadcast %7 : vector<8x1x16xf32> to vector<8x16x16xf32>
    %16 = arith.subf %0, %15 : vector<8x16x16xf32>
    %17 = vector.broadcast %14 : vector<8x1x16xf32> to vector<8x16x16xf32>
    %18 = arith.mulf %16, %17 : vector<8x16x16xf32>
    %c0_6 = arith.constant 0 : index
    %c0_7 = arith.constant 0 : index
    %c0_8 = arith.constant 0 : index
    %19 = vector.load %arg2[%c0_6, %c0_7, %c0_8] : memref<8x16x16xf32, #tpu.memory_space<vmem>>, vector<8x16x16xf32>
    tpu.vector_store %arg2[%c0_6, %c0_7, %c0_8], %18 {strides = array<i32>} : memref<8x16x16xf32, #tpu.memory_space<vmem>>, vector<8x16x16xf32>,
    return
  }
  func.func @transform_0(%arg0: i32) -> (i32, i32, i32) {
    %c0_i32 = arith.constant 0 : i32
    %c0_i32_0 = arith.constant 0 : i32
    %c0_i32_1 = arith.constant 0 : i32
    return %arg0, %c0_i32, %c0_i32_0 : i32, i32, i32
  }
  func.func @transform_1(%arg0: i32) -> (i32, i32, i32) {
    %c0_i32 = arith.constant 0 : i32
    %c0_i32_0 = arith.constant 0 : i32
    %c0_i32_1 = arith.constant 0 : i32
    return %arg0, %c0_i32, %c0_i32_0 : i32, i32, i32
  }
}

</mosaic_0001>

<llo_original>
// kernel: tpu_custom_call.1
$region0: #{tpu_custom_call.1}
  #allocation0 [shape = 'u32[]', space=smem, size = 0x4, offset = 0x4, fixed_abs, tag = 'smem constant byte address 0x4 - core index']
  #allocation1 [shape = 'u32[144,128]{1,0:T(1,128)}', space=vmem, size = 0x12000, scoped, tag = 'internal scratch']
  %s0 = inlined_call_operand.hbm [shape: f32[8,16,16], index: 0, kind: input, shape index: {}]
  %s1 = inlined_call_operand.hbm [shape: f32[8,16,16], index: 1, kind: output, shape index: {}]
  %s2 = sld [smem:[#allocation0]]
  $region18: #{tpu_custom_call.1} parent=0
    _
  %s4 = ssub.s32 1, %s2
  %s5 = scalar_select 0, %s4, %s2
  $region1: #{tpu_custom_call.1} parent=0
    #allocation2 [shape = 'u8[65536]{0}', space=vmem, size = 0x10000, scoped, tag = 'input window, operand 0, single buffered']
    #allocation3 [shape = 's32[1]{0}', space=sflag, size = 0x4, scoped, tag = 'scoped memory for tpu_custom_call.1']
    #allocation4 [shape = 's32[1]{0}', space=sflag, size = 0x4, scoped, tag = 'scoped memory for tpu_custom_call.1']
    #allocation5 [shape = 'u8[65536]{0}', space=vmem, size = 0x10000, scoped, tag = 'output window, operand 0, single buffered']
    %6 = vsyncpa [#allocation3], 0
    %7 = vsyncpa [#allocation4], 0
    // Predicated region
    $region2: #{tpu_custom_call.1} parent=1 // pred_check
      _
    $region3: #{tpu_custom_call.1} parent=1 // pred_check_branch
      %9 = sbr.rel (0) target = $region5
    $region4: #{tpu_custom_call.1} parent=1 // pred_region
      %s11 = ssub.s32 2048, 2048
      %12 = vsyncadd [#allocation3], %s11
      %s13 = sshll.u32 [#allocation2], 4
      %s14 = int_to_ptr.vmem [resolvable:$true] %s13
      %19 = dma.hbm_to_vmem [thread:$0]  %s0, 2048, %s14, [#allocation3], 128, 128, 8
    $region5: #{tpu_custom_call.1} parent=1 // pred_fallthru
      _
    // Predicated region
    $region6: #{tpu_custom_call.1} parent=1 // pred_check
      _
    $region7: #{tpu_custom_call.1} parent=1 // pred_check_branch
      %21 = sbr.rel (0) target = $region9
    $region8: #{tpu_custom_call.1} parent=1 // pred_region
      %22 = dma.done [#allocation3], 2048
    $region9: #{tpu_custom_call.1} parent=1 // pred_fallthru
      _
    %v23 = vld [vmem:[#allocation2] sm:$0xff]
    %v24 = vld [vmem:[#allocation2 + $0x8] sm:$0xff]
    %v25 = vld [vmem:[#allocation2 + $0x10] sm:$0xff]
    %v26 = vld [vmem:[#allocation2 + $0x18] sm:$0xff]
    %v27 = vld [vmem:[#allocation2 + $0x20] sm:$0xff]
    %v28 = vld [vmem:[#allocation2 + $0x28] sm:$0xff]
    %v29 = vld [vmem:[#allocation2 + $0x30] sm:$0xff]
    %v30 = vld [vmem:[#allocation2 + $0x38] sm:$0xff]
    %v31 = vld [vmem:[#allocation2 + $0x40] sm:$0xff]
    %v32 = vld [vmem:[#allocation2 + $0x48] sm:$0xff]
    %v33 = vld [vmem:[#allocation2 + $0x50] sm:$0xff]
    %v34 = vld [vmem:[#allocation2 + $0x58] sm:$0xff]
    %v35 = vld [vmem:[#allocation2 + $0x60] sm:$0xff]
    %v36 = vld [vmem:[#allocation2 + $0x68] sm:$0xff]
    %v37 = vld [vmem:[#allocation2 + $0x70] sm:$0xff]
    %v38 = vld [vmem:[#allocation2 + $0x78] sm:$0xff]
    %vm39 = vcmask 130048
    %v40 = vsel %vm39, %v23, 0.0
    %v41 = vsel %vm39, %v24, 0.0
    %v42 = vadd.f32 %v40, %v41
    %v43 = vrot.slane %v42, 4
    %v44 = vadd.f32 %v42, %v43
    %v45 = vrot.slane %v44, 2
    %v46 = vadd.f32 %v44, %v45
    %v47 = vrot.slane %v46, 1
    %v48 = vadd.f32 %v46, %v47
    %v49 = vsel %vm39, %v25, 0.0
    %v50 = vsel %vm39, %v26, 0.0
    %v51 = vadd.f32 %v49, %v50
    %v52 = vrot.slane %v51, 4
    %v53 = vadd.f32 %v51, %v52
    %v54 = vrot.slane %v53, 2
    %v55 = vadd.f32 %v53, %v54
    %v56 = vrot.slane %v55, 1
    %v57 = vadd.f32 %v55, %v56
    %v58 = vsel %vm39, %v27, 0.0
    %v59 = vsel %vm39, %v28, 0.0
    %v60 = vadd.f32 %v58, %v59
    %v61 = vrot.slane %v60, 4
    %v62 = vadd.f32 %v60, %v61
    %v63 = vrot.slane %v62, 2
    %v64 = vadd.f32 %v62, %v63
    %v65 = vrot.slane %v64, 1
    %v66 = vadd.f32 %v64, %v65
    %v67 = vsel %vm39, %v29, 0.0
    %v68 = vsel %vm39, %v30, 0.0
    %v69 = vadd.f32 %v67, %v68
    %v70 = vrot.slane %v69, 4
    %v71 = vadd.f32 %v69, %v70
    %v72 = vrot.slane %v71, 2
    %v73 = vadd.f32 %v71, %v72
    %v74 = vrot.slane %v73, 1
    %v75 = vadd.f32 %v73, %v74
    %v76 = vsel %vm39, %v31, 0.0
    %v77 = vsel %vm39, %v32, 0.0
    %v78 = vadd.f32 %v76, %v77
    %v79 = vrot.slane %v78, 4
    %v80 = vadd.f32 %v78, %v79
    %v81 = vrot.slane %v80, 2
    %v82 = vadd.f32 %v80, %v81
    %v83 = vrot.slane %v82, 1
    %v84 = vadd.f32 %v82, %v83
    %v85 = vsel %vm39, %v33, 0.0
    %v86 = vsel %vm39, %v34, 0.0
    %v87 = vadd.f32 %v85, %v86
    %v88 = vrot.slane %v87, 4
    %v89 = vadd.f32 %v87, %v88
    %v90 = vrot.slane %v89, 2
    %v91 = vadd.f32 %v89, %v90
    %v92 = vrot.slane %v91, 1
    %v93 = vadd.f32 %v91, %v92
    %v94 = vsel %vm39, %v35, 0.0
    %v95 = vsel %vm39, %v36, 0.0
    %v96 = vadd.f32 %v94, %v95
    %v97 = vrot.slane %v96, 4
    %v98 = vadd.f32 %v96, %v97
    %v99 = vrot.slane %v98, 2
    %v100 = vadd.f32 %v98, %v99
    %v101 = vrot.slane %v100, 1
    %v102 = vadd.f32 %v100, %v101
    %v103 = vsel %vm39, %v37, 0.0
    %v104 = vsel %vm39, %v38, 0.0
    %v105 = vadd.f32 %v103, %v104
    %v106 = vrot.slane %v105, 4
    %v107 = vadd.f32 %v105, %v106
    %v108 = vrot.slane %v107, 2
    %v109 = vadd.f32 %v107, %v108
    %v110 = vrot.slane %v109, 1
    %v111 = vadd.f32 %v109, %v110
    %v112 = vmul.f32 %v23, %v23
    %v113 = vmul.f32 %v24, %v24
    %v114 = vmul.f32 %v25, %v25
    %v115 = vmul.f32 %v26, %v26
    %v116 = vmul.f32 %v27, %v27
    %v117 = vmul.f32 %v28, %v28
    %v118 = vmul.f32 %v29, %v29
    %v119 = vmul.f32 %v30, %v30
    %v120 = vmul.f32 %v31, %v31
    %v121 = vmul.f32 %v32, %v32
    %v122 = vmul.f32 %v33, %v33
    %v123 = vmul.f32 %v34, %v34
    %v124 = vmul.f32 %v35, %v35
    %v125 = vmul.f32 %v36, %v36
    %v126 = vmul.f32 %v37, %v37
    %v127 = vmul.f32 %v38, %v38
    %v128 = vsel %vm39, %v112, 0.0
    %v129 = vsel %vm39, %v113, 0.0
    %v130 = vadd.f32 %v128, %v129
    %v131 = vrot.slane %v130, 4
    %v132 = vadd.f32 %v130, %v131
    %v133 = vrot.slane %v132, 2
    %v134 = vadd.f32 %v132, %v133
    %v135 = vrot.slane %v134, 1
    %v136 = vadd.f32 %v134, %v135
    %v137 = vsel %vm39, %v114, 0.0
    %v138 = vsel %vm39, %v115, 0.0
    %v139 = vadd.f32 %v137, %v138
    %v140 = vrot.slane %v139, 4
    %v141 = vadd.f32 %v139, %v140
    %v142 = vrot.slane %v141, 2
    %v143 = vadd.f32 %v141, %v142
    %v144 = vrot.slane %v143, 1
    %v145 = vadd.f32 %v143, %v144
    %v146 = vsel %vm39, %v116, 0.0
    %v147 = vsel %vm39, %v117, 0.0
    %v148 = vadd.f32 %v146, %v147
    %v149 = vrot.slane %v148, 4
    %v150 = vadd.f32 %v148, %v149
    %v151 = vrot.slane %v150, 2
    %v152 = vadd.f32 %v150, %v151
    %v153 = vrot.slane %v152, 1
    %v154 = vadd.f32 %v152, %v153
    %v155 = vsel %vm39, %v118, 0.0
    %v156 = vsel %vm39, %v119, 0.0
    %v157 = vadd.f32 %v155, %v156
    %v158 = vrot.slane %v157, 4
    %v159 = vadd.f32 %v157, %v158
    %v160 = vrot.slane %v159, 2
    %v161 = vadd.f32 %v159, %v160
    %v162 = vrot.slane %v161, 1
    %v163 = vadd.f32 %v161, %v162
    %v164 = vsel %vm39, %v120, 0.0
    %v165 = vsel %vm39, %v121, 0.0
    %v166 = vadd.f32 %v164, %v165
    %v167 = vrot.slane %v166, 4
    %v168 = vadd.f32 %v166, %v167
    %v169 = vrot.slane %v168, 2
    %v170 = vadd.f32 %v168, %v169
    %v171 = vrot.slane %v170, 1
    %v172 = vadd.f32 %v170, %v171
    %v173 = vsel %vm39, %v122, 0.0
    %v174 = vsel %vm39, %v123, 0.0
    %v175 = vadd.f32 %v173, %v174
    %v176 = vrot.slane %v175, 4
    %v177 = vadd.f32 %v175, %v176
    %v178 = vrot.slane %v177, 2
    %v179 = vadd.f32 %v177, %v178
    %v180 = vrot.slane %v179, 1
    %v181 = vadd.f32 %v179, %v180
    %v182 = vsel %vm39, %v124, 0.0
    %v183 = vsel %vm39, %v125, 0.0
    %v184 = vadd.f32 %v182, %v183
    %v185 = vrot.slane %v184, 4
    %v186 = vadd.f32 %v184, %v185
    %v187 = vrot.slane %v186, 2
    %v188 = vadd.f32 %v186, %v187
    %v189 = vrot.slane %v188, 1
    %v190 = vadd.f32 %v188, %v189
    %v191 = vsel %vm39, %v126, 0.0
    %v192 = vsel %vm39, %v127, 0.0
    %v193 = vadd.f32 %v191, %v192
    %v194 = vrot.slane %v193, 4
    %v195 = vadd.f32 %v193, %v194
    %v196 = vrot.slane %v195, 2
    %v197 = vadd.f32 %v195, %v196
    %v198 = vrot.slane %v197, 1
    %v199 = vadd.f32 %v197, %v198
    %v200 = vmul.f32 %v48, 0.0625
    %v201 = vmul.f32 %v57, 0.0625
    %v202 = vmul.f32 %v66, 0.0625
    %v203 = vmul.f32 %v75, 0.0625
    %v204 = vmul.f32 %v84, 0.0625
    %v205 = vmul.f32 %v93, 0.0625
    %v206 = vmul.f32 %v102, 0.0625
    %v207 = vmul.f32 %v111, 0.0625
    %v208 = vmul.f32 %v48, %v200
    %v209 = vmul.f32 %v57, %v201
    %v210 = vmul.f32 %v66, %v202
    %v211 = vmul.f32 %v75, %v203
    %v212 = vmul.f32 %v84, %v204
    %v213 = vmul.f32 %v93, %v205
    %v214 = vmul.f32 %v102, %v206
    %v215 = vmul.f32 %v111, %v207
    %v216 = vsub.f32 %v136, %v208
    %v217 = vsub.f32 %v145, %v209
    %v218 = vsub.f32 %v154, %v210
    %v219 = vsub.f32 %v163, %v211
    %v220 = vsub.f32 %v172, %v212
    %v221 = vsub.f32 %v181, %v213
    %v222 = vsub.f32 %v190, %v214
    %v223 = vsub.f32 %v199, %v215
    %v224 = vmul.f32 %v216, 0.06666667
    %v225 = vmul.f32 %v217, 0.06666667
    %v226 = vmul.f32 %v218, 0.06666667
    %v227 = vmul.f32 %v219, 0.06666667
    %v228 = vmul.f32 %v220, 0.06666667
    %v229 = vmul.f32 %v221, 0.06666667
    %v230 = vmul.f32 %v222, 0.06666667
    %v231 = vmul.f32 %v223, 0.06666667
    %v232 = vadd.f32 %v224, 0.001
    %v233 = vadd.f32 %v225, 0.001
    %v234 = vadd.f32 %v226, 0.001
    %v235 = vadd.f32 %v227, 0.001
    %v236 = vadd.f32 %v228, 0.001
    %v237 = vadd.f32 %v229, 0.001
    %v238 = vadd.f32 %v230, 0.001
    %v239 = vadd.f32 %v231, 0.001
    %v240 = vrsqrt.pop %v232
    %v241 = vrsqrt.pop %v233
    %v242 = vrsqrt.pop %v234
    %v243 = vrsqrt.pop %v235
    %v244 = vrsqrt.pop %v236
    %v245 = vrsqrt.pop %v237
    %v246 = vrsqrt.pop %v238
    %v247 = vrsqrt.pop %v239
    %v248 = vsub.f32 %v23, %v200
    %v249 = vsub.f32 %v24, %v200
    %v250 = vsub.f32 %v25, %v201
    %v251 = vsub.f32 %v26, %v201
    %v252 = vsub.f32 %v27, %v202
    %v253 = vsub.f32 %v28, %v202
    %v254 = vsub.f32 %v29, %v203
    %v255 = vsub.f32 %v30, %v203
    %v256 = vsub.f32 %v31, %v204
    %v257 = vsub.f32 %v32, %v204
    %v258 = vsub.f32 %v33, %v205
    %v259 = vsub.f32 %v34, %v205
    %v260 = vsub.f32 %v35, %v206
    %v261 = vsub.f32 %v36, %v206
    %v262 = vsub.f32 %v37, %v207
    %v263 = vsub.f32 %v38, %v207
    %v264 = vmul.f32 %v248, %v240
    %v265 = vmul.f32 %v249, %v240
    %v266 = vmul.f32 %v250, %v241
    %v267 = vmul.f32 %v251, %v241
    %v268 = vmul.f32 %v252, %v242
    %v269 = vmul.f32 %v253, %v242
    %v270 = vmul.f32 %v254, %v243
    %v271 = vmul.f32 %v255, %v243
    %v272 = vmul.f32 %v256, %v244
    %v273 = vmul.f32 %v257, %v244
    %v274 = vmul.f32 %v258, %v245
    %v275 = vmul.f32 %v259, %v245
    %v276 = vmul.f32 %v260, %v246
    %v277 = vmul.f32 %v261, %v246
    %v278 = vmul.f32 %v262, %v247
    %v279 = vmul.f32 %v263, %v247
    %280 = vst.msk [vmem:[#allocation5] sm:$0xff] %vm39, %v264
    %281 = vst.msk [vmem:[#allocation5 + $0x8] sm:$0xff] %vm39, %v265
    %282 = vst.msk [vmem:[#allocation5 + $0x10] sm:$0xff] %vm39, %v266
    %283 = vst.msk [vmem:[#allocation5 + $0x18] sm:$0xff] %vm39, %v267
    %284 = vst.msk [vmem:[#allocation5 + $0x20] sm:$0xff] %vm39, %v268
    %285 = vst.msk [vmem:[#allocation5 + $0x28] sm:$0xff] %vm39, %v269
    %286 = vst.msk [vmem:[#allocation5 + $0x30] sm:$0xff] %vm39, %v270
    %287 = vst.msk [vmem:[#allocation5 + $0x38] sm:$0xff] %vm39, %v271
    %288 = vst.msk [vmem:[#allocation5 + $0x40] sm:$0xff] %vm39, %v272
    %289 = vst.msk [vmem:[#allocation5 + $0x48] sm:$0xff] %vm39, %v273
    %290 = vst.msk [vmem:[#allocation5 + $0x50] sm:$0xff] %vm39, %v274
    %291 = vst.msk [vmem:[#allocation5 + $0x58] sm:$0xff] %vm39, %v275
    %292 = vst.msk [vmem:[#allocation5 + $0x60] sm:$0xff] %vm39, %v276
    %293 = vst.msk [vmem:[#allocation5 + $0x68] sm:$0xff] %vm39, %v277
    %294 = vst.msk [vmem:[#allocation5 + $0x70] sm:$0xff] %vm39, %v278
    %295 = vst.msk [vmem:[#allocation5 + $0x78] sm:$0xff] %vm39, %v279
    // Predicated region
    $region10: #{tpu_custom_call.1} parent=1 // pred_check
      _
    $region11: #{tpu_custom_call.1} parent=1 // pred_check_branch
      %297 = sbr.rel (0) target = $region13
    $region12: #{tpu_custom_call.1} parent=1 // pred_region
      %s299 = ssub.s32 2048, 2048
      %300 = vsyncadd [#allocation4], %s299
      %s301 = sshll.u32 [#allocation5], 4
      %s302 = int_to_ptr.vmem [resolvable:$true] %s301
      %307 = dma.vmem_to_hbm [thread:$0]  %s302, 2048, %s1, [#allocation4], 128, 128, 8
    $region13: #{tpu_custom_call.1} parent=1 // pred_fallthru
      _
    // Predicated region
    $region14: #{tpu_custom_call.1} parent=1 // pred_check
      _
    $region15: #{tpu_custom_call.1} parent=1 // pred_check_branch
      %309 = sbr.rel (0) target = $region17
    $region16: #{tpu_custom_call.1} parent=1 // pred_region
      %310 = dma.done [#allocation4], 2048
    $region17: #{tpu_custom_call.1} parent=1 // pred_fallthru
      _
    %311 = vsyncpa [#allocation3], 1
    %312 = vsyncpa [#allocation4], 1

</llo_original>
